<compile_context>
chip_gen: v7x
topology: tpu7x:2x2x1
jax: 0.10.0
libtpu: 0.0.40
codegen_flags: <defaults>
</compile_context>

<pallas_src>
import jax
import jax.numpy as jnp
from jax.experimental import pallas as pl
from jax.experimental.pallas import tpu as pltpu

_LANES = 128
_SUBLANES = 8


def _round_up(n, m):
    return ((n + m - 1) // m) * m


def _logreg_kernel(x_ref, w_ref, b_ref, o_ref):
    # x_ref: (2, TILE_R, 128) VMEM (dense per-feature planes)
    # w_ref: (2,) SMEM, b_ref: (1,) SMEM, o_ref: (TILE_R, 128) VMEM.
    w0 = w_ref[0]
    w1 = w_ref[1]
    b0 = b_ref[0]
    x0 = x_ref[0]                      # (TILE_R, 128), 8 sublanes fully used
    x1 = x_ref[1]
    z = x0 * w0 + x1 * w1 + b0         # pure VPU, scalars broadcast once/tile
    # Numerically-stable sigmoid: e = exp(-|z|) in (0,1];
    #   sigmoid(z) = 1/(1+e) if z >= 0 else e/(1+e)
    e = jnp.exp(-jnp.abs(z))           # EUP slot
    r = pl.reciprocal(1.0 + e, approx=False)  # exact: keeps 1e-5 parity
    p = jnp.where(z >= 0, r, e * r)
    o_ref[...] = p.astype(o_ref.dtype)


def logistic_regression(x, w, b, *, target_rows=4096):
    """x: [B, 2], w: [2, 1] (nn.Linear weight transposed), b: [1] -> [B, 1] f32.

    target_rows: rows of 128 samples per grid step (4096 rows ~= 512K samples,
    ~12 MiB of double-buffered VMEM blocks -- fits v5e/v6e/v7x).
    """
    x = jnp.asarray(x, jnp.float32)
    B, F = x.shape
    assert F == 2
    w_vec = jnp.asarray(w, jnp.float32).reshape(2)
    b_vec = jnp.asarray(b, jnp.float32).reshape(1)

    # --- tile selection -----------------------------------------------------
    rows = pl.cdiv(B, _LANES)                      # 128 samples per row
    min_split_rows = 512                           # ~64K samples: keep per-step
                                                   # DMA >> 0.35us fixed overhead
    if rows >= 2 * min_split_rows:
        # Large batch: ensure >= 2 grid steps so ("parallel",) can use both
        # TensorCores on v7x, but never drop below min_split_rows per tile.
        tile_r = min(target_rows,
                     max(min_split_rows, _round_up(pl.cdiv(rows, 2), _SUBLANES)))
    else:
        tile_r = min(target_rows, _round_up(max(rows, 1), _SUBLANES))
    tile_r = _round_up(tile_r, _SUBLANES)

    grid_r = pl.cdiv(rows, tile_r)
    R = grid_r * tile_r
    b_pad = R * _LANES

    # Double-buffered in (2,tile_r,128) + out (tile_r,128) blocks, + headroom.
    block_bytes = 2 * (2 + 1) * tile_r * _LANES * 4
    vmem_limit = int(max(block_bytes + (4 << 20), 32 << 20))

    # --- input prep: ONE fused pad+transpose+reshape pass --------------------
    # (2, R, 128): feature-major, each plane sublane/lane dense; the ragged
    # tail is zero-padded and sliced off at the end.
    x_pad = x if b_pad == B else jnp.pad(x, ((0, b_pad - B), (0, 0)))
    x_t = x_pad.T.reshape(2, R, _LANES)

    out2d = pl.pallas_call(
        _logreg_kernel,
        out_shape=jax.ShapeDtypeStruct((R, _LANES), jnp.float32),
        grid=(grid_r,),
        in_specs=[
            pl.BlockSpec((2, tile_r, _LANES), lambda i: (0, i, 0)),
            pl.BlockSpec(memory_space=pltpu.MemorySpace.SMEM),   # weights (2,)
            pl.BlockSpec(memory_space=pltpu.MemorySpace.SMEM),   # bias (1,)
        ],
        out_specs=pl.BlockSpec((tile_r, _LANES), lambda i: (i, 0)),
        compiler_params=pltpu.CompilerParams(
            dimension_semantics=("parallel",),
            vmem_limit_bytes=vmem_limit,
        ),
    )(x_t, w_vec, b_vec)

    # Flat order of (R, 128) is exactly sample order -> free reshape.
    out = out2d.reshape(b_pad, 1)
    if b_pad != B:
        out = out[:B]
    return out


if __name__ == "__main__":
    key = jax.random.PRNGKey(0)
    kx, kw, kb, kx2 = jax.random.split(key, 4)

    # nn.Linear(2, 1) parameters: weight [1,2] stored transposed as [2,1]; bias [1].
    bound = 1.0 / jnp.sqrt(2.0)
    w = jax.random.uniform(kw, (2, 1), minval=-bound, maxval=bound, dtype=jnp.float32)
    bias = jax.random.uniform(kb, (1,), minval=-bound, maxval=bound, dtype=jnp.float32)

    # Small batch (matches the PyTorch harness scale).
    B = 8
    x = jax.random.normal(kx, (B, 2), dtype=jnp.float32)
    out = jax.block_until_ready(logistic_regression(x, w, bias))
    ref = jax.nn.sigmoid(x @ w + bias.reshape(1, 1))
    assert out.shape == (B, 1)
    assert jnp.allclose(out, ref, atol=1e-5, rtol=1e-5)

    # Multi-row batch with a ragged tail; small target_rows forces a 3-step grid
    # to exercise the pipelined/multi-tile path.
    B2 = 2100
    x2 = jax.random.normal(kx2, (B2, 2), dtype=jnp.float32)
    out2 = jax.block_until_ready(logistic_regression(x2, w, bias, target_rows=8))
    ref2 = jax.nn.sigmoid(x2 @ w + bias.reshape(1, 1))
    assert out2.shape == (B2, 1)
    assert jnp.allclose(out2, ref2, atol=1e-5, rtol=1e-5)

    print("KERNEL_OK")
</pallas_src>

<mosaic_0001>
module attributes {stable_mosaic.version = 11 : i64} {
  func.func @_logreg_kernel(%arg0: i32, %arg1: memref<2x8x128xf32, #tpu.memory_space<vmem>>, %arg2: memref<2xf32, #tpu.memory_space<smem>>, %arg3: memref<1xf32, #tpu.memory_space<smem>>, %arg4: memref<8x128xf32, #tpu.memory_space<vmem>>) attributes {dimension_semantics = [#tpu.dimension_semantics<parallel>], iteration_bounds = array<i64: 1>, scalar_prefetch = 0 : i64, scratch_operands = 0 : i64, tpu.core_type = #tpu.core_type<tc>, window_params = [{transform_indices = @transform_0, window_bounds = array<i64: 2, 8, 128>}, {transform_indices = @transform_1, window_bounds = array<i64: 2>}, {transform_indices = @transform_2, window_bounds = array<i64: 1>}, {transform_indices = @transform_3, window_bounds = array<i64: 8, 128>}]} {
    %c0 = arith.constant 0 : index
    %0 = memref.load %arg2[%c0] : memref<2xf32, #tpu.memory_space<smem>>
    %c1 = arith.constant 1 : index
    %1 = memref.load %arg2[%c1] : memref<2xf32, #tpu.memory_space<smem>>
    %c0_0 = arith.constant 0 : index
    %2 = memref.load %arg3[%c0_0] : memref<1xf32, #tpu.memory_space<smem>>
    %c0_1 = arith.constant 0 : index
    %c0_2 = arith.constant 0 : index
    %c0_3 = arith.constant 0 : index
    %3 = vector.load %arg1[%c0_1, %c0_2, %c0_3] : memref<2x8x128xf32, #tpu.memory_space<vmem>>, vector<1x8x128xf32>
    %4 = vector.shape_cast %3 : vector<1x8x128xf32> to vector<8x128xf32>
    %c1_4 = arith.constant 1 : index
    %c0_5 = arith.constant 0 : index
    %c0_6 = arith.constant 0 : index
    %5 = vector.load %arg1[%c1_4, %c0_5, %c0_6] : memref<2x8x128xf32, #tpu.memory_space<vmem>>, vector<1x8x128xf32>
    %6 = vector.shape_cast %5 : vector<1x8x128xf32> to vector<8x128xf32>
    %7 = vector.broadcast %0 : f32 to vector<8x128xf32>
    %8 = arith.mulf %4, %7 : vector<8x128xf32>
    %9 = vector.broadcast %1 : f32 to vector<8x128xf32>
    %10 = arith.mulf %6, %9 : vector<8x128xf32>
    %11 = arith.addf %8, %10 : vector<8x128xf32>
    %12 = vector.broadcast %2 : f32 to vector<8x128xf32>
    %13 = arith.addf %11, %12 : vector<8x128xf32>
    %14 = math.absf %13 : vector<8x128xf32>
    %cst = arith.constant 0.000000e+00 : f32
    %15 = vector.broadcast %cst : f32 to vector<8x128xf32>
    %16 = arith.subf %15, %14 : vector<8x128xf32>
    %17 = math.exp %16 : vector<8x128xf32>
    %cst_7 = arith.constant 1.000000e+00 : f32
    %18 = vector.broadcast %cst_7 : f32 to vector<8x128xf32>
    %19 = arith.addf %18, %17 : vector<8x128xf32>
    %20 = tpu.reciprocal %19 : vector<8x128xf32> -> vector<8x128xf32>
    %cst_8 = arith.constant 0.000000e+00 : f32
    %21 = vector.broadcast %cst_8 : f32 to vector<8x128xf32>
    %22 = arith.cmpf oge, %13, %21 : vector<8x128xf32>
    %23 = arith.mulf %17, %20 : vector<8x128xf32>
    %24 = arith.select %22, %20, %23 : vector<8x128xi1>, vector<8x128xf32>
    %c0_9 = arith.constant 0 : index
    %c0_10 = arith.constant 0 : index
    %25 = vector.load %arg4[%c0_9, %c0_10] : memref<8x128xf32, #tpu.memory_space<vmem>>, vector<8x128xf32>
    tpu.vector_store %arg4[%c0_9, %c0_10], %24 {strides = array<i32>} : memref<8x128xf32, #tpu.memory_space<vmem>>, vector<8x128xf32>,
    return
  }
  func.func @transform_0(%arg0: i32) -> (i32, i32, i32) {
    %c0_i32 = arith.constant 0 : i32
    %c0_i32_0 = arith.constant 0 : i32
    %c0_i32_1 = arith.constant 0 : i32
    return %c0_i32, %arg0, %c0_i32_0 : i32, i32, i32
  }
  func.func @transform_1(%arg0: i32) -> i32 {
    %c0_i32 = arith.constant 0 : i32
    %c0_i32_0 = arith.constant 0 : i32
    return %c0_i32 : i32
  }
  func.func @transform_2(%arg0: i32) -> i32 {
    %c0_i32 = arith.constant 0 : i32
    %c0_i32_0 = arith.constant 0 : i32
    return %c0_i32 : i32
  }
  func.func @transform_3(%arg0: i32) -> (i32, i32) {
    %c0_i32 = arith.constant 0 : i32
    %c0_i32_0 = arith.constant 0 : i32
    return %arg0, %c0_i32 : i32, i32
  }
}

</mosaic_0001>

<llo_original>
// kernel: tpu_custom_call.1
$region0: #{tpu_custom_call.1}
  #allocation0 [shape = 'u32[]', space=smem, size = 0x4, offset = 0x4, fixed_abs, tag = 'smem constant byte address 0x4 - core index']
  #allocation1 [shape = 'u32[144,128]{1,0:T(1,128)}', space=vmem, size = 0x12000, scoped, tag = 'internal scratch']
  #allocation2 [shape = 'f32[1]{0:T(128)S(6)}', space=smem, size = 0x200, scoped, tag = 'scoped memory for tpu_custom_call.1']
  %s0 = inlined_call_operand.hbm [shape: f32[2,8,128], index: 0, kind: input, shape index: {}]
  %s1 = inlined_call_operand.vmem [shape: f32[2], index: 1, kind: input, shape index: {}]
  %s2 = inlined_call_operand.<no memory space> [shape: f32[1], index: 2, kind: input, shape index: {}]
  %s3 = inlined_call_operand.hbm [shape: f32[8,128], index: 3, kind: output, shape index: {}]
  %s4 = sld [smem:[#allocation0]]
  $region30: #{tpu_custom_call.1} parent=0
    _
  %s6 = ssub.s32 1, %s4
  %s7 = scalar_select 0, %s6, %s4
  %8 = sst [smem:[#allocation2]] %s2
  $region1: #{tpu_custom_call.1} parent=0
    #allocation3 [shape = 'u8[8192]{0}', space=vmem, size = 0x2000, scoped, tag = 'input window, operand 0, single buffered']
    #allocation4 [shape = 's32[1]{0}', space=sflag, size = 0x4, scoped, tag = 'scoped memory for tpu_custom_call.1']
    #allocation5 [shape = 's32[1]{0}', space=sflag, size = 0x4, scoped, tag = 'scoped memory for tpu_custom_call.1']
    #allocation6 [shape = 's32[1]{0}', space=sflag, size = 0x4, scoped, tag = 'scoped memory for tpu_custom_call.1']
    #allocation7 [shape = 'u8[512]{0}', space=smem, size = 0x200, scoped, tag = 'input window, operand 1, single buffered']
    #allocation8 [shape = 'u8[4096]{0}', space=vmem, size = 0x1000, scoped, tag = 'output window, operand 0, single buffered']
    %9 = vsyncpa [#allocation4], 0
    %10 = vsyncpa [#allocation6], 0
    %11 = vsyncpa [#allocation5], 0
    // Predicated region
    $region2: #{tpu_custom_call.1} parent=1 // pred_check
      _
    $region3: #{tpu_custom_call.1} parent=1 // pred_check_branch
      %13 = sbr.rel (0) target = $region5
    $region4: #{tpu_custom_call.1} parent=1 // pred_region
      %s15 = ssub.s32 256, 256
      %16 = vsyncadd [#allocation4], %s15
      %s17 = sshll.u32 [#allocation3], 4
      %s18 = int_to_ptr.vmem [resolvable:$true] %s17
      %23 = dma.hbm_to_vmem [thread:$0]  %s0, 256, %s18, [#allocation4], 128, 128, 8
    $region5: #{tpu_custom_call.1} parent=1 // pred_fallthru
      _
    // Predicated region
    $region6: #{tpu_custom_call.1} parent=1 // pred_check
      _
    $region7: #{tpu_custom_call.1} parent=1 // pred_check_branch
      %25 = sbr.rel (0) target = $region9
    $region8: #{tpu_custom_call.1} parent=1 // pred_region
      %s27 = ssub.s32 16, 16
      %28 = vsyncadd [#allocation6], %s27
      %s30 = sshll.u32 %s1, 4
      %s31 = int_to_ptr.vmem [resolvable:$true] %s30
      %33 = dma.vmem_to_smem %s31, 16, [#allocation7], [#allocation6]
    $region9: #{tpu_custom_call.1} parent=1 // pred_fallthru
      _
    // Predicated region
    $region10: #{tpu_custom_call.1} parent=1 // pred_check
      _
    $region11: #{tpu_custom_call.1} parent=1 // pred_check_branch
      %35 = sbr.rel (0) target = $region13
    $region12: #{tpu_custom_call.1} parent=1 // pred_region
      _
    $region13: #{tpu_custom_call.1} parent=1 // pred_fallthru
      _
    // Predicated region
    $region14: #{tpu_custom_call.1} parent=1 // pred_check
      _
    $region15: #{tpu_custom_call.1} parent=1 // pred_check_branch
      %37 = sbr.rel (0) target = $region17
    $region16: #{tpu_custom_call.1} parent=1 // pred_region
      %38 = dma.done [#allocation4], 256
    $region17: #{tpu_custom_call.1} parent=1 // pred_fallthru
      _
    // Predicated region
    $region18: #{tpu_custom_call.1} parent=1 // pred_check
      _
    $region19: #{tpu_custom_call.1} parent=1 // pred_check_branch
      %40 = sbr.rel (0) target = $region21
    $region20: #{tpu_custom_call.1} parent=1 // pred_region
      %41 = dma.done [#allocation6], 16
    $region21: #{tpu_custom_call.1} parent=1 // pred_fallthru
      _
    %42 = sfence
    %s43 = sld [smem:[#allocation7]]
    %s44 = sld [smem:[#allocation7 + $0x1]]
    %s45 = sld [smem:[#allocation2]]
    %v46 = vld [vmem:[#allocation3] sm:$0xff]
    %s47 = scalar_lea.vmem [#allocation3], 8
    %v48 = vld [vmem:[%s47] sm:$0xff]
    %v49 = vstv %s43
    %v50 = vmul.f32 %v46, %v49
    %v51 = vstv %s44
    %v52 = vmul.f32 %v48, %v51
    %v53 = vadd.f32 %v50, %v52
    %v54 = vstv %s45
    %v55 = vadd.f32 %v53, %v54
    %v56 = vand.u32 2147483647, %v55
    %v57 = vsub.f32 0.0, %v56
    %v58 = vmul.f32 %v57, 1.442695
    %v59 = vpow.pop %v58
    %v60 = vadd.f32 %v59, 1.0
    %v61 = vrcp.pop %v60
    %vm62 = vcmp.ge.f32.partialorder %v55, 0.0
    %v63 = vmul.f32 %v59, %v61
    %v64 = vsel %vm62, %v61, %v63
    %65 = vst [vmem:[#allocation8] sm:$0xff] %v64
    // Predicated region
    $region22: #{tpu_custom_call.1} parent=1 // pred_check
      _
    $region23: #{tpu_custom_call.1} parent=1 // pred_check_branch
      %67 = sbr.rel (0) target = $region25
    $region24: #{tpu_custom_call.1} parent=1 // pred_region
      %s69 = ssub.s32 128, 128
      %70 = vsyncadd [#allocation5], %s69
      %s72 = sshll.u32 [#allocation8], 4
      %s73 = int_to_ptr.vmem [resolvable:$true] %s72
      %75 = dma.vmem_to_hbm [thread:$0]  %s73, 128, %s3, [#allocation5]
    $region25: #{tpu_custom_call.1} parent=1 // pred_fallthru
      _
    // Predicated region
    $region26: #{tpu_custom_call.1} parent=1 // pred_check
      _
    $region27: #{tpu_custom_call.1} parent=1 // pred_check_branch
      %77 = sbr.rel (0) target = $region29
    $region28: #{tpu_custom_call.1} parent=1 // pred_region
      %78 = dma.done [#allocation5], 128
    $region29: #{tpu_custom_call.1} parent=1 // pred_fallthru
      _
    %79 = vsyncpa [#allocation4], 1
    %80 = vsyncpa [#allocation5], 1
    %81 = vsyncpa [#allocation6], 1

</llo_original>
